<compile_context>
chip_gen: v7x
topology: tpu7x:2x2x1
jax: 0.10.0
libtpu: 0.0.40
codegen_flags: <defaults>
</compile_context>

<pallas_src>
import jax
import jax.numpy as jnp
from jax.experimental import pallas as pl
from jax.experimental.pallas import tpu as pltpu


def _round_up(x, m):
    return ((x + m - 1) // m) * m


def _tile_candidates(dim, align=128):
    """Valid column-tile sizes: multiples of `align` dividing `dim` (descending)."""
    if dim % align != 0:
        return [dim]
    return [t for t in range(dim, 0, -align) if dim % t == 0]


def _vmem_estimate(tm, tn, F, L_pad, cbytes):
    """Rough VMEM footprint with default double-buffering on streamed operands."""
    return (2 * tm * F * cbytes          # x tile (resident across the n sweep)
            + 2 * F * tn * cbytes        # W1 column slice (streamed)
            + 2 * tn * 4                 # b1 slice (f32)
            + 2 * tn * L_pad * cbytes    # W2 row slice (streamed)
            + 2 * L_pad * 4              # b2 (f32)
            + tm * L_pad * 4             # f32 output accumulator scratch
            + 2 * tm * L_pad * 4)        # f32 partial-output block


def _head_kernel(x_ref, w1_ref, b1_ref, w2_ref, b2_ref, o_ref, acc_ref):
    """One (m-tile, W1-column-slice) step of  out = tanh(x @ W1 + b1) @ W2 + b2."""
    p = pl.program_id(0)                       # column-parallel shard
    n = pl.program_id(2)                       # column slice within the shard

    @pl.when(n == 0)
    def _init():
        acc_ref[...] = jnp.zeros_like(acc_ref)

    # h slab for this W1 column slice (f32 accumulation on the MXU).
    h = jnp.tanh(
        jnp.dot(x_ref[...], w1_ref[...], preferred_element_type=jnp.float32)
        + b1_ref[...])
    # Contribution of this slab to the output projection.
    acc_ref[...] += jnp.dot(h.astype(w2_ref.dtype), w2_ref[...],
                            preferred_element_type=jnp.float32)

    @pl.when(n == pl.num_programs(2) - 1)
    def _finalize():
        # b2 is added exactly once across the column-parallel shards (p == 0).
        bias2 = jnp.where(p == 0, b2_ref[...], jnp.zeros_like(b2_ref[...]))
        o_ref[0] = acc_ref[...] + bias2
    # TODO(synk): nn.Dropout is identity in eval/inference; training-mode dropout
    # would use pltpu.prng_seed + pltpu.stateful_bernoulli on x and h.


def prepare_roberta_head_params(w1, b1, w2, b2, *, compute_dtype=jnp.bfloat16):
    """One-time weight preparation (module init) -- NOT per forward call.

    w1: [4H, 4H] in (in, out) layout; b1: [4H]; w2: [4H, L]; b2: [L].
    """
    F = w1.shape[0]
    L = w2.shape[1]
    L_pad = _round_up(max(L, 128), 128)          # lane-dense output block
    return dict(
        w1=w1.astype(compute_dtype),
        b1=b1.astype(jnp.float32).reshape(1, F),
        w2=jnp.zeros((F, L_pad), compute_dtype).at[:, :L].set(
            w2.astype(compute_dtype)),
        b2=jnp.zeros((1, L_pad), jnp.float32).at[0, :L].set(
            b2.astype(jnp.float32)),
        num_labels=L,
    )


def roberta_head_apply(x, params, *, tm_max=1024, tn_max=1024, n_par=None):
    """out[B, L] = tanh(x @ W1 + b1) @ W2 + b2, with params from
    prepare_roberta_head_params()."""
    w1c, b1_row, w2p, b2_row = params["w1"], params["b1"], params["w2"], params["b2"]
    L = params["num_labels"]
    B, F = x.shape
    L_pad = w2p.shape[1]
    out_dtype = x.dtype
    compute_dtype = w1c.dtype
    cbytes = jnp.dtype(compute_dtype).itemsize
    sub = 8 * (4 // cbytes)              # sublane multiple: 8 for f32, 16 for bf16

    # ---- per-generation VMEM budget ------------------------------------
    try:
        vmem_cap = int(getattr(pltpu.get_tpu_info(), "vmem_capacity_bytes",
                               64 << 20))
    except Exception:                    # query unavailable (e.g. interpret mode)
        vmem_cap = 64 << 20              # assume smallest-VMEM generation (v7x)
    budget = (vmem_cap * 3) // 4         # ~96 MiB on v5e/v6e, ~48 MiB on v7x

    # ---- tile selection --------------------------------------------------
    # Prefer a single m (batch) tile so W1 streams through HBM exactly once;
    # shrink the column tile tn first, and only then the batch tile.
    tm = min(_round_up(B, sub), _round_up(tm_max, sub))
    cands = _tile_candidates(F)
    tn_cands = [t for t in cands if t <= tn_max] or [cands[-1]]
    tn = tn_cands[-1]
    for t in tn_cands:
        if _vmem_estimate(tm, t, F, L_pad, cbytes) <= budget:
            tn = t
            break
    while _vmem_estimate(tm, tn, F, L_pad, cbytes) > budget and tm > sub:
        # Very-large-batch fallback: multiple m tiles (W1 re-streamed per tile).
        tm = max(sub, _round_up(tm // 2, sub))

    B_pad = _round_up(B, tm)
    num_m = B_pad // tm
    n_total = F // tn

    # Column-parallel shards (leading "parallel" grid axis).  Default 2 when
    # the column sweep splits evenly: near-free on single-TC chips, lets the
    # two v7x TensorCores each stream half of W1.
    if n_par is None:
        n_par = 2 if (n_total % 2 == 0 and n_total >= 2) else 1
    elif n_total % n_par != 0:
        n_par = 1
    n_inner = n_total // n_par

    # Activations: cast + pad (cheap; weights were prepared once up front).
    xp = jnp.zeros((B_pad, F), compute_dtype).at[:B, :].set(
        x.astype(compute_dtype))

    est = _vmem_estimate(tm, tn, F, L_pad, cbytes)
    # Never set the limit below the estimate; cap for headroom per generation.
    vmem_limit = int(max(min(est + (4 << 20), budget), est, 16 << 20))

    cost = pl.CostEstimate(
        flops=2 * B_pad * F * F + 2 * B_pad * F * L_pad,
        transcendentals=B_pad * F,
        bytes_accessed=(B_pad * F * cbytes            # x (one read per m tile)
                        + num_m * F * F * cbytes      # W1 stream
                        + num_m * F * 4               # b1
                        + num_m * F * L_pad * cbytes  # W2 stream
                        + L_pad * 4                   # b2
                        + n_par * B_pad * L_pad * 4), # partial outputs
    )

    parts = pl.pallas_call(
        _head_kernel,
        out_shape=jax.ShapeDtypeStruct((n_par, B_pad, L_pad), jnp.float32),
        grid_spec=pltpu.PrefetchScalarGridSpec(
            num_scalar_prefetch=0,
            grid=(n_par, num_m, n_inner),
            in_specs=[
                pl.BlockSpec((tm, F), lambda p, m, n: (m, 0)),        # x (resident)
                pl.BlockSpec((F, tn),
                             lambda p, m, n: (0, p * n_inner + n)),   # W1 col slice
                pl.BlockSpec((1, tn),
                             lambda p, m, n: (0, p * n_inner + n)),   # b1 slice
                pl.BlockSpec((tn, L_pad),
                             lambda p, m, n: (p * n_inner + n, 0)),   # W2 row slice
                pl.BlockSpec((1, L_pad), lambda p, m, n: (0, 0)),     # b2
            ],
            out_specs=pl.BlockSpec((1, tm, L_pad), lambda p, m, n: (p, m, 0)),
            scratch_shapes=[pltpu.VMEM((tm, L_pad), jnp.float32)],
        ),
        compiler_params=pltpu.CompilerParams(
            dimension_semantics=("parallel", "parallel", "arbitrary"),
            vmem_limit_bytes=vmem_limit),
        cost_estimate=cost,
    )(xp, w1c, b1_row, w2p, b2_row)

    out = parts[0] if n_par == 1 else jnp.sum(parts, axis=0)
    return out[:B, :L].astype(out_dtype)


def roberta_head_four_pooling(x, w1, b1, w2, b2, *,
                              compute_dtype=jnp.bfloat16, **kwargs):
    """Convenience one-shot API; for repeated calls prepare params once."""
    params = prepare_roberta_head_params(w1, b1, w2, b2,
                                         compute_dtype=compute_dtype)
    return roberta_head_apply(x, params, **kwargs)


def reference(x, w1, b1, w2, b2):
    h = jnp.tanh(x @ w1 + b1)
    return h @ w2 + b2


if __name__ == "__main__":
    key = jax.random.PRNGKey(0)

    def make_inputs(k, batch, feat, num_labels):
        k_x, k_w1, k_b1, k_w2, k_b2 = jax.random.split(k, 5)
        x = jax.random.normal(k_x, (batch, feat), dtype=jnp.float32)
        # PyTorch nn.Linear stores weight as [out, in]; we initialize directly
        # in [in, out] (transposed) layout for the kernel's x @ W convention.
        w1 = jax.random.normal(k_w1, (feat, feat), dtype=jnp.float32) * 0.02
        b1 = jax.random.normal(k_b1, (feat,), dtype=jnp.float32) * 0.02
        w2 = jax.random.normal(k_w2, (feat, num_labels), dtype=jnp.float32) * 0.02
        b2 = jax.random.normal(k_b2, (num_labels,), dtype=jnp.float32) * 0.02
        return x, w1, b1, w2, b2

    k1, k2, k3 = jax.random.split(key, 3)

    # Case 1: toy config implied by the module (hidden=32 -> 4H=128, L=3, B=2),
    # exact f32 path, single m tile, single column tile.
    x, w1, b1, w2, b2 = make_inputs(k1, batch=2, feat=32 * 4, num_labels=3)
    params = prepare_roberta_head_params(w1, b1, w2, b2,
                                         compute_dtype=jnp.float32)
    out = jax.block_until_ready(roberta_head_apply(x, params))
    ref = reference(x, w1, b1, w2, b2)
    assert out.shape == (2, 3), out.shape
    assert jnp.allclose(out, ref, atol=1e-5, rtol=1e-5)

    # Case 2: column streaming without the parallel split, bf16 compute
    # (hidden=64 -> 4H=256, L=5, B=20; tn=128 -> 2 accumulation steps).
    x, w1, b1, w2, b2 = make_inputs(k2, batch=20, feat=64 * 4, num_labels=5)
    params = prepare_roberta_head_params(w1, b1, w2, b2,
                                         compute_dtype=jnp.bfloat16)
    out = jax.block_until_ready(
        roberta_head_apply(x, params, tn_max=128, n_par=1))
    ref = reference(x, w1, b1, w2, b2)
    assert out.shape == (20, 5), out.shape
    assert jnp.allclose(out, ref, atol=2e-2, rtol=2e-2)

    # Case 3: column-parallel split (n_par=2) + inner accumulation + the
    # multi-m-tile fallback (hidden=128 -> 4H=512, L=2, B=40, tm_max=16,
    # tn=128 -> grid (2, 3, 2)); prepared params reused across two calls.
    x, w1, b1, w2, b2 = make_inputs(k3, batch=40, feat=128 * 4, num_labels=2)
    params = prepare_roberta_head_params(w1, b1, w2, b2,
                                         compute_dtype=jnp.bfloat16)
    out = jax.block_until_ready(
        roberta_head_apply(x, params, tm_max=16, tn_max=128))
    out2 = jax.block_until_ready(
        roberta_head_apply(x, params, tm_max=16, tn_max=128))
    ref = reference(x, w1, b1, w2, b2)
    assert out.shape == (40, 2), out.shape
    assert jnp.allclose(out, ref, atol=2e-2, rtol=2e-2)
    assert jnp.allclose(out, out2)

    print("KERNEL_OK")
</pallas_src>

<mosaic_0001>
module attributes {stable_mosaic.version = 11 : i64} {
  func.func @_head_kernel(%arg0: i32, %arg1: i32, %arg2: i32, %arg3: memref<8x128xf32, #tpu.memory_space<vmem>>, %arg4: memref<128x128xf32, #tpu.memory_space<vmem>>, %arg5: memref<1x128xf32, #tpu.memory_space<vmem>>, %arg6: memref<128x128xf32, #tpu.memory_space<vmem>>, %arg7: memref<1x128xf32, #tpu.memory_space<vmem>>, %arg8: memref<1x8x128xf32, #tpu.memory_space<vmem>>, %arg9: memref<8x128xf32, #tpu.memory_space<vmem>>) attributes {dimension_semantics = [#tpu.dimension_semantics<parallel>, #tpu.dimension_semantics<parallel>, #tpu.dimension_semantics<arbitrary>], iteration_bounds = array<i64: 1, 1, 1>, scalar_prefetch = 0 : i64, scratch_operands = 1 : i64, tpu.core_type = #tpu.core_type<tc>, window_params = [{transform_indices = @transform_0, window_bounds = array<i64: 8, 128>}, {transform_indices = @transform_1, window_bounds = array<i64: 128, 128>}, {transform_indices = @transform_2, window_bounds = array<i64: 1, 128>}, {transform_indices = @transform_3, window_bounds = array<i64: 128, 128>}, {pipeline_mode = #tpu.pipeline_mode<synchronous>, transform_indices = @transform_4, window_bounds = array<i64: 1, 128>}, {transform_indices = @transform_5, window_bounds = array<i64: 1, 8, 128>}]} {
    %c0_i32 = arith.constant 0 : i32
    %0 = arith.cmpi eq, %arg2, %c0_i32 : i32
    %1 = arith.extui %0 : i1 to i32
    %c0_i32_0 = arith.constant 0 : i32
    %2 = arith.cmpi ne, %1, %c0_i32_0 : i32
    scf.if %2 {
      %cst_15 = arith.constant 0.000000e+00 : f32
      %18 = vector.broadcast %cst_15 : f32 to vector<8x128xf32>
      %c0_16 = arith.constant 0 : index
      %c0_17 = arith.constant 0 : index
      %19 = vector.load %arg9[%c0_16, %c0_17] : memref<8x128xf32, #tpu.memory_space<vmem>>, vector<8x128xf32>
      tpu.vector_store %arg9[%c0_16, %c0_17], %18 {strides = array<i32>} : memref<8x128xf32, #tpu.memory_space<vmem>>, vector<8x128xf32>,
    } else {
    }
    %c0 = arith.constant 0 : index
    %c0_1 = arith.constant 0 : index
    %3 = vector.load %arg3[%c0, %c0_1] : memref<8x128xf32, #tpu.memory_space<vmem>>, vector<8x128xf32>
    %c0_2 = arith.constant 0 : index
    %c0_3 = arith.constant 0 : index
    %4 = vector.load %arg4[%c0_2, %c0_3] : memref<128x128xf32, #tpu.memory_space<vmem>>, vector<128x128xf32>
    %cst = arith.constant dense<0.000000e+00> : vector<8x128xf32>
    %5 = tpu.matmul %3, %4, %cst {dimension_numbers = #tpu.dot_dimension_numbers<[1], [0], [0], [1], [0, 0, 1, 1], [], []>} : vector<8x128xf32>, vector<128x128xf32>, vector<8x128xf32> -> vector<8x128xf32>
    %c0_4 = arith.constant 0 : index
    %c0_5 = arith.constant 0 : index
    %6 = vector.load %arg5[%c0_4, %c0_5] : memref<1x128xf32, #tpu.memory_space<vmem>>, vector<1x128xf32>
    %7 = vector.broadcast %6 : vector<1x128xf32> to vector<8x128xf32>
    %8 = arith.addf %5, %7 : vector<8x128xf32>
    %9 = math.tanh %8 : vector<8x128xf32>
    %c0_6 = arith.constant 0 : index
    %c0_7 = arith.constant 0 : index
    %10 = vector.load %arg9[%c0_6, %c0_7] : memref<8x128xf32, #tpu.memory_space<vmem>>, vector<8x128xf32>
    %c0_8 = arith.constant 0 : index
    %c0_9 = arith.constant 0 : index
    %11 = vector.load %arg6[%c0_8, %c0_9] : memref<128x128xf32, #tpu.memory_space<vmem>>, vector<128x128xf32>
    %cst_10 = arith.constant dense<0.000000e+00> : vector<8x128xf32>
    %12 = tpu.matmul %9, %11, %cst_10 {dimension_numbers = #tpu.dot_dimension_numbers<[1], [0], [0], [1], [0, 0, 1, 1], [], []>} : vector<8x128xf32>, vector<128x128xf32>, vector<8x128xf32> -> vector<8x128xf32>
    %13 = arith.addf %10, %12 : vector<8x128xf32>
    %c0_11 = arith.constant 0 : index
    %c0_12 = arith.constant 0 : index
    %14 = vector.load %arg9[%c0_11, %c0_12] : memref<8x128xf32, #tpu.memory_space<vmem>>, vector<8x128xf32>
    tpu.vector_store %arg9[%c0_11, %c0_12], %13 {strides = array<i32>} : memref<8x128xf32, #tpu.memory_space<vmem>>, vector<8x128xf32>,
    %c0_i32_13 = arith.constant 0 : i32
    %15 = arith.cmpi eq, %arg2, %c0_i32_13 : i32
    %16 = arith.extui %15 : i1 to i32
    %c0_i32_14 = arith.constant 0 : i32
    %17 = arith.cmpi ne, %16, %c0_i32_14 : i32
    scf.if %17 {
      %c0_i32_15 = arith.constant 0 : i32
      %18 = arith.cmpi eq, %arg0, %c0_i32_15 : i32
      %c0_16 = arith.constant 0 : index
      %c0_17 = arith.constant 0 : index
      %19 = vector.load %arg7[%c0_16, %c0_17] : memref<1x128xf32, #tpu.memory_space<vmem>>, vector<1x128xf32>
      %cst_18 = arith.constant 0.000000e+00 : f32
      %20 = vector.broadcast %cst_18 : f32 to vector<1x128xf32>
      %21 = arith.select %18, %19, %20 : vector<1x128xf32>
      %c0_19 = arith.constant 0 : index
      %c0_20 = arith.constant 0 : index
      %22 = vector.load %arg9[%c0_19, %c0_20] : memref<8x128xf32, #tpu.memory_space<vmem>>, vector<8x128xf32>
      %23 = vector.broadcast %21 : vector<1x128xf32> to vector<8x128xf32>
      %24 = arith.addf %22, %23 : vector<8x128xf32>
      %c0_21 = arith.constant 0 : index
      %c0_22 = arith.constant 0 : index
      %c0_23 = arith.constant 0 : index
      %25 = vector.load %arg8[%c0_21, %c0_22, %c0_23] : memref<1x8x128xf32, #tpu.memory_space<vmem>>, vector<1x8x128xf32>
      %26 = vector.shape_cast %25 : vector<1x8x128xf32> to vector<8x128xf32>
      %27 = vector.shape_cast %24 : vector<8x128xf32> to vector<1x8x128xf32>
      tpu.vector_store %arg8[%c0_21, %c0_22, %c0_23], %27 {strides = array<i32>} : memref<1x8x128xf32, #tpu.memory_space<vmem>>, vector<1x8x128xf32>,
    } else {
    }
    return
  }
  func.func @transform_0(%arg0: i32, %arg1: i32, %arg2: i32) -> (i32, i32) {
    %c0_i32 = arith.constant 0 : i32
    %c0_i32_0 = arith.constant 0 : i32
    return %arg1, %c0_i32 : i32, i32
  }
  func.func @transform_1(%arg0: i32, %arg1: i32, %arg2: i32) -> (i32, i32) {
    %c1_i32 = arith.constant 1 : i32
    %0 = arith.muli %arg0, %c1_i32 : i32
    %1 = arith.addi %0, %arg2 : i32
    %c0_i32 = arith.constant 0 : i32
    %c0_i32_0 = arith.constant 0 : i32
    return %c0_i32, %1 : i32, i32
  }
  func.func @transform_2(%arg0: i32, %arg1: i32, %arg2: i32) -> (i32, i32) {
    %c1_i32 = arith.constant 1 : i32
    %0 = arith.muli %arg0, %c1_i32 : i32
    %1 = arith.addi %0, %arg2 : i32
    %c0_i32 = arith.constant 0 : i32
    %c0_i32_0 = arith.constant 0 : i32
    return %c0_i32, %1 : i32, i32
  }
  func.func @transform_3(%arg0: i32, %arg1: i32, %arg2: i32) -> (i32, i32) {
    %c1_i32 = arith.constant 1 : i32
    %0 = arith.muli %arg0, %c1_i32 : i32
    %1 = arith.addi %0, %arg2 : i32
    %c0_i32 = arith.constant 0 : i32
    %c0_i32_0 = arith.constant 0 : i32
    return %1, %c0_i32 : i32, i32
  }
  func.func @transform_4(%arg0: i32, %arg1: i32, %arg2: i32) -> (i32, i32) {
    %c0_i32 = arith.constant 0 : i32
    %c0_i32_0 = arith.constant 0 : i32
    %c0_i32_1 = arith.constant 0 : i32
    return %c0_i32, %c0_i32_0 : i32, i32
  }
  func.func @transform_5(%arg0: i32, %arg1: i32, %arg2: i32) -> (i32, i32, i32) {
    %c0_i32 = arith.constant 0 : i32
    %c0_i32_0 = arith.constant 0 : i32
    return %arg0, %arg1, %c0_i32 : i32, i32, i32
  }
}

</mosaic_0001>

<llo_original>
// kernel: tpu_custom_call.1
$region0: #{tpu_custom_call.1}
  #allocation0 [shape = 'u32[]', space=smem, size = 0x4, offset = 0x4, fixed_abs, tag = 'smem constant byte address 0x4 - core index']
  #allocation1 [shape = 'u32[144,128]{1,0:T(1,128)}', space=vmem, size = 0x12000, scoped, tag = 'internal scratch']
  #allocation2 [shape = 'f32[8,128]{1,0:T(8,128)}', space=vmem, size = 0x1000, scoped, tag = 'scratch operand']
  %s0 = inlined_call_operand.hbm [shape: f32[8,128], index: 0, kind: input, shape index: {}]
  %s1 = inlined_call_operand.hbm [shape: f32[128,128], index: 1, kind: input, shape index: {}]
  %s2 = inlined_call_operand.vmem [shape: f32[1,128], index: 2, kind: input, shape index: {}]
  %s3 = inlined_call_operand.hbm [shape: f32[128,128], index: 3, kind: input, shape index: {}]
  %s4 = inlined_call_operand.vmem [shape: f32[1,128], index: 4, kind: input, shape index: {}]
  %s5 = inlined_call_operand.hbm [shape: f32[1,8,128], index: 5, kind: output, shape index: {}]
  %s6 = sld [smem:[#allocation0]]
  $region50: #{tpu_custom_call.1} parent=0
    _
  %s8 = ssub.s32 1, %s6
  %s9 = scalar_select 0, %s8, %s6
  $region1: #{tpu_custom_call.1} parent=0
    #allocation3 [shape = 'u8[4096]{0}', space=vmem, size = 0x1000, scoped, tag = 'input window, operand 0, single buffered']
    #allocation4 [shape = 's32[1]{0}', space=sflag, size = 0x4, scoped, tag = 'scoped memory for tpu_custom_call.1']
    #allocation5 [shape = 's32[1]{0}', space=sflag, size = 0x4, scoped, tag = 'scoped memory for tpu_custom_call.1']
    #allocation6 [shape = 'u8[65536]{0}', space=vmem, size = 0x10000, scoped, tag = 'input window, operand 1, single buffered']
    #allocation7 [shape = 's32[1]{0}', space=sflag, size = 0x4, scoped, tag = 'scoped memory for tpu_custom_call.1']
    #allocation8 [shape = 'u8[65536]{0}', space=vmem, size = 0x10000, scoped, tag = 'input window, operand 3, single buffered']
    #allocation9 [shape = 'u8[4096]{0}', space=vmem, size = 0x1000, scoped, tag = 'output window, operand 0, single buffered']
    %10 = vsyncpa [#allocation4], 0
    %11 = vsyncpa [#allocation7], 0
    %12 = vsyncpa [#allocation5], 0
    // Predicated region
    $region2: #{tpu_custom_call.1} parent=1 // pred_check
      _
    $region3: #{tpu_custom_call.1} parent=1 // pred_check_branch
      %14 = sbr.rel (0) target = $region5
    $region4: #{tpu_custom_call.1} parent=1 // pred_region
      %s16 = ssub.s32 128, 128
      %17 = vsyncadd [#allocation4], %s16
      %s19 = sshll.u32 [#allocation3], 4
      %s20 = int_to_ptr.vmem [resolvable:$true] %s19
      %22 = dma.hbm_to_vmem [thread:$0]  %s0, 128, %s20, [#allocation4]
    $region5: #{tpu_custom_call.1} parent=1 // pred_fallthru
      _
    // Predicated region
    $region6: #{tpu_custom_call.1} parent=1 // pred_check
      _
    $region7: #{tpu_custom_call.1} parent=1 // pred_check_branch
      %24 = sbr.rel (0) target = $region9
    $region8: #{tpu_custom_call.1} parent=1 // pred_region
      %s25 = sadd.s32 0, 0
      %s27 = ssub.s32 2048, 2048
      %28 = vsyncadd [#allocation7], %s27
      %s29 = smul.addr %s25, 128
      %s30 = scalar_lea.hbm %s1, %s29
      %s31 = sshll.u32 [#allocation6], 4
      %s32 = int_to_ptr.vmem [resolvable:$true] %s31
      %37 = dma.hbm_to_vmem [thread:$0]  %s30, 2048, %s32, [#allocation7], 128, 128, 8
    $region9: #{tpu_custom_call.1} parent=1 // pred_fallthru
      _
    // Predicated region
    $region10: #{tpu_custom_call.1} parent=1 // pred_check
      _
    $region11: #{tpu_custom_call.1} parent=1 // pred_check_branch
      %39 = sbr.rel (0) target = $region13
    $region12: #{tpu_custom_call.1} parent=1 // pred_region
      %s40 = sadd.s32 0, 0
      %p41 = scmp.lt.s32.totalorder %s40, 0
      %s42 = scalar_select %p41, %s40, 0
      %s43 = scalar_lea.vmem %s2, %s42
      %s44 = sadd.s32 0, 0
    $region13: #{tpu_custom_call.1} parent=1 // pred_fallthru
      _
    // Predicated region
    $region14: #{tpu_custom_call.1} parent=1 // pred_check
      _
    $region15: #{tpu_custom_call.1} parent=1 // pred_check_branch
      %46 = sbr.rel (0) target = $region17
    $region16: #{tpu_custom_call.1} parent=1 // pred_region
      %s47 = sadd.s32 0, 0
      %s48 = smul.u32 16, %s47
      %s50 = ssub.s32 2048, 2048
      %51 = vsyncadd [#allocation7], %s50
      %s52 = smul.addr %s48, 128
      %s53 = scalar_lea.hbm %s3, %s52
      %s54 = sshll.u32 [#allocation8], 4
      %s55 = int_to_ptr.vmem [resolvable:$true] %s54
      %60 = dma.hbm_to_vmem [thread:$0]  %s53, 2048, %s55, [#allocation7], 128, 128, 8
    $region17: #{tpu_custom_call.1} parent=1 // pred_fallthru
      _
    // Predicated region
    $region18: #{tpu_custom_call.1} parent=1 // pred_check
      _
    $region19: #{tpu_custom_call.1} parent=1 // pred_check_branch
      %62 = sbr.rel (0) target = $region21
    $region20: #{tpu_custom_call.1} parent=1 // pred_region
      _
    $region21: #{tpu_custom_call.1} parent=1 // pred_fallthru
      _
    // Predicated region
    $region22: #{tpu_custom_call.1} parent=1 // pred_check
      _
    $region23: #{tpu_custom_call.1} parent=1 // pred_check_branch
      %64 = sbr.rel (0) target = $region25
    $region24: #{tpu_custom_call.1} parent=1 // pred_region
      %65 = dma.done [#allocation4], 128
    $region25: #{tpu_custom_call.1} parent=1 // pred_fallthru
      _
    // Predicated region
    $region26: #{tpu_custom_call.1} parent=1 // pred_check
      _
    $region27: #{tpu_custom_call.1} parent=1 // pred_check_branch
      %67 = sbr.rel (0) target = $region29
    $region28: #{tpu_custom_call.1} parent=1 // pred_region
      %68 = dma.done [#allocation7], 2048
    $region29: #{tpu_custom_call.1} parent=1 // pred_fallthru
      _
    // Predicated region
    $region30: #{tpu_custom_call.1} parent=1 // pred_check
      _
    $region31: #{tpu_custom_call.1} parent=1 // pred_check_branch
      %70 = sbr.rel (0) target = $region33
    $region32: #{tpu_custom_call.1} parent=1 // pred_region
      %71 = dma.done [#allocation7], 2048
    $region33: #{tpu_custom_call.1} parent=1 // pred_fallthru
      _
    %s72 = sadd.s32 0, 0
    %p73 = scmp.lt.s32.totalorder %s72, 0
    %s74 = scalar_select %p73, %s72, 0
    %s75 = scalar_lea.vmem %s2, %s74
    %s76 = sadd.s32 0, 0
    %s77 = sadd.s32 0, 0
    %p78 = scmp.lt.s32.totalorder %s77, 0
    %s79 = scalar_select %p78, %s77, 0
    %s80 = scalar_lea.vmem %s2, %s79
    %s81 = sadd.s32 0, 0
    %s82 = sadd.s32 0, 0
    %s83 = smul.u32 16, %s82
    %p84 = scmp.eq.s32.totalorder 0, 0
    // Predicated region
    $region34: #{tpu_custom_call.1} parent=1 // pred_check
      %p85 = pneg %p84
    $region35: #{tpu_custom_call.1} parent=1 // pred_check_branch
      %87 = sbr.rel (%p85) target = $region37
    $region36: #{tpu_custom_call.1} parent=1 // pred_region
      %88 = vst [vmem:[#allocation2] sm:$0xff] 0.0
    $region37: #{tpu_custom_call.1} parent=1 // pred_fallthru
      _
    %v89 = vld [vmem:[#allocation3] sm:$0xff]
    %v90 = vld [vmem:[#allocation6] sm:$0xff]
    %v91 = vld [vmem:[#allocation6 + $0x8] sm:$0xff]
    %v92 = vld [vmem:[#allocation6 + $0x10] sm:$0xff]
    %v93 = vld [vmem:[#allocation6 + $0x18] sm:$0xff]
    %v94 = vld [vmem:[#allocation6 + $0x20] sm:$0xff]
    %v95 = vld [vmem:[#allocation6 + $0x28] sm:$0xff]
    %v96 = vld [vmem:[#allocation6 + $0x30] sm:$0xff]
    %v97 = vld [vmem:[#allocation6 + $0x38] sm:$0xff]
    %v98 = vld [vmem:[#allocation6 + $0x40] sm:$0xff]
    %v99 = vld [vmem:[#allocation6 + $0x48] sm:$0xff]
    %v100 = vld [vmem:[#allocation6 + $0x50] sm:$0xff]
    %v101 = vld [vmem:[#allocation6 + $0x58] sm:$0xff]
    %v102 = vld [vmem:[#allocation6 + $0x60] sm:$0xff]
    %v103 = vld [vmem:[#allocation6 + $0x68] sm:$0xff]
    %v104 = vld [vmem:[#allocation6 + $0x70] sm:$0xff]
    %v105 = vld [vmem:[#allocation6 + $0x78] sm:$0xff]
    %v106 = vld [vmem:[%s80] sm:$0x1]
    %v108 = vlaneseq
    %v109 = vshrl.u32 %v108, 7
    %v110 = vsub.s32 0, %v109
    %v111 = vrot.slane %v106, %v110
    %113 = vmatprep.subr.mxu0 0.0
    %114 = vmatpush1.msra.mxu0 %v90
    %115 = vmatprep.subr.mxu0 0.0
    %116 = vmatpush1.msra.mxu0 %v91
    %117 = vmatprep.subr.mxu0 0.0
    %118 = vmatpush1.msra.mxu0 %v92
    %119 = vmatprep.subr.mxu0 0.0
    %120 = vmatpush1.msra.mxu0 %v93
    %121 = vmatprep.subr.mxu0 0.0
    %122 = vmatpush1.msra.mxu0 %v94
    %123 = vmatprep.subr.mxu0 0.0
    %124 = vmatpush1.msra.mxu0 %v95
    %125 = vmatprep.subr.mxu0 0.0
    %126 = vmatpush1.msra.mxu0 %v96
    %127 = vmatprep.subr.mxu0 0.0
    %128 = vmatpush1.msra.mxu0 %v97
    %129 = vmatprep.subr.mxu0 0.0
    %130 = vmatpush1.msra.mxu0 %v98
    %131 = vmatprep.subr.mxu0 0.0
    %132 = vmatpush1.msra.mxu0 %v99
    %133 = vmatprep.subr.mxu0 0.0
    %134 = vmatpush1.msra.mxu0 %v100
    %135 = vmatprep.subr.mxu0 0.0
    %136 = vmatpush1.msra.mxu0 %v101
    %137 = vmatprep.subr.mxu0 0.0
    %138 = vmatpush1.msra.mxu0 %v102
    %139 = vmatprep.subr.mxu0 0.0
    %140 = vmatpush1.msra.mxu0 %v103
    %141 = vmatprep.subr.mxu0 0.0
    %142 = vmatpush1.msra.mxu0 %v104
    %143 = vmatprep.subr.mxu0 0.0
    %144 = vmatpush1.msra.mxu0 %v105
    %145 = vmatprep.subr.mxu0 0.0
    %146 = vmatpush1.msra.mxu0 0.0
    %147 = vmatprep.subr.mxu0 0.0
    %148 = vmatpush1.msra.mxu0 0.0
    %149 = vmatprep.subr.mxu0 0.0
    %150 = vmatpush1.msra.mxu0 0.0
    %151 = vmatprep.subr.mxu0 0.0
    %152 = vmatpush1.msra.mxu0 0.0
    %153 = vmatprep.subr.mxu0 0.0
    %154 = vmatpush1.msra.mxu0 0.0
    %155 = vmatprep.subr.mxu0 0.0
    %156 = vmatpush1.msra.mxu0 0.0
    %157 = vmatprep.subr.mxu0 0.0
    %158 = vmatpush1.msra.mxu0 0.0
    %159 = vmatprep.subr.mxu0 0.0
    %160 = vmatpush1.msra.mxu0 0.0
    %161 = vmatprep.subr.mxu0 0.0
    %162 = vmatpush1.msra.mxu0 0.0
    %163 = vmatprep.subr.mxu0 0.0
    %164 = vmatpush1.msra.mxu0 0.0
    %165 = vmatprep.subr.mxu0 0.0
    %166 = vmatpush1.msra.mxu0 0.0
    %167 = vmatprep.subr.mxu0 0.0
    %168 = vmatpush1.msra.mxu0 0.0
    %169 = vmatprep.subr.mxu0 0.0
    %170 = vmatpush1.msra.mxu0 0.0
    %171 = vmatprep.subr.mxu0 0.0
    %172 = vmatpush1.msra.mxu0 0.0
    %173 = vmatprep.subr.mxu0 0.0
    %174 = vmatpush1.msra.mxu0 0.0
    %175 = vmatprep.subr.mxu0 0.0
    %176 = vmatpush1.msra.mxu0 0.0
    %177 = vmatprep.mubr.f32.mxu0 0.0
    %178 = vmatmul.mubr.f32.gmra.mrb[0].mxu0 %v89
    %v179 = vpop.f32.mrb[0].mxu0
    %v180 = vadd.f32 %v111, %v179
    %v181 = vpop.f32.mrb[0].mxu0
    %182 = vdwg.mxu0
    %v183 = vtanh.pop %v180
    %v184 = vld [vmem:[#allocation2] sm:$0xff]
    %v185 = vld [vmem:[#allocation8] sm:$0xff]
    %v186 = vld [vmem:[#allocation8 + $0x8] sm:$0xff]
    %v187 = vld [vmem:[#allocation8 + $0x10] sm:$0xff]
    %v188 = vld [vmem:[#allocation8 + $0x18] sm:$0xff]
    %v189 = vld [vmem:[#allocation8 + $0x20] sm:$0xff]
    %v190 = vld [vmem:[#allocation8 + $0x28] sm:$0xff]
    %v191 = vld [vmem:[#allocation8 + $0x30] sm:$0xff]
    %v192 = vld [vmem:[#allocation8 + $0x38] sm:$0xff]
    %v193 = vld [vmem:[#allocation8 + $0x40] sm:$0xff]
    %v194 = vld [vmem:[#allocation8 + $0x48] sm:$0xff]
    %v195 = vld [vmem:[#allocation8 + $0x50] sm:$0xff]
    %v196 = vld [vmem:[#allocation8 + $0x58] sm:$0xff]
    %v197 = vld [vmem:[#allocation8 + $0x60] sm:$0xff]
    %v198 = vld [vmem:[#allocation8 + $0x68] sm:$0xff]
    %v199 = vld [vmem:[#allocation8 + $0x70] sm:$0xff]
    %v200 = vld [vmem:[#allocation8 + $0x78] sm:$0xff]
    %201 = vmatprep.subr.mxu0 0.0
    %202 = vmatpush1.msra.mxu0 %v185
    %203 = vmatprep.subr.mxu0 0.0
    %204 = vmatpush1.msra.mxu0 %v186
    %205 = vmatprep.subr.mxu0 0.0
    %206 = vmatpush1.msra.mxu0 %v187
    %207 = vmatprep.subr.mxu0 0.0
    %208 = vmatpush1.msra.mxu0 %v188
    %209 = vmatprep.subr.mxu0 0.0
    %210 = vmatpush1.msra.mxu0 %v189
    %211 = vmatprep.subr.mxu0 0.0
    %212 = vmatpush1.msra.mxu0 %v190
    %213 = vmatprep.subr.mxu0 0.0
    %214 = vmatpush1.msra.mxu0 %v191
    %215 = vmatprep.subr.mxu0 0.0
    %216 = vmatpush1.msra.mxu0 %v192
    %217 = vmatprep.subr.mxu0 0.0
    %218 = vmatpush1.msra.mxu0 %v193
    %219 = vmatprep.subr.mxu0 0.0
    %220 = vmatpush1.msra.mxu0 %v194
    %221 = vmatprep.subr.mxu0 0.0
    %222 = vmatpush1.msra.mxu0 %v195
    %223 = vmatprep.subr.mxu0 0.0
    %224 = vmatpush1.msra.mxu0 %v196
    %225 = vmatprep.subr.mxu0 0.0
    %226 = vmatpush1.msra.mxu0 %v197
    %227 = vmatprep.subr.mxu0 0.0
    %228 = vmatpush1.msra.mxu0 %v198
    %229 = vmatprep.subr.mxu0 0.0
    %230 = vmatpush1.msra.mxu0 %v199
    %231 = vmatprep.subr.mxu0 0.0
    %232 = vmatpush1.msra.mxu0 %v200
    %233 = vmatprep.subr.mxu0 0.0
    %234 = vmatpush1.msra.mxu0 0.0
    %235 = vmatprep.subr.mxu0 0.0
    %236 = vmatpush1.msra.mxu0 0.0
    %237 = vmatprep.subr.mxu0 0.0
    %238 = vmatpush1.msra.mxu0 0.0
    %239 = vmatprep.subr.mxu0 0.0
    %240 = vmatpush1.msra.mxu0 0.0
    %241 = vmatprep.subr.mxu0 0.0
    %242 = vmatpush1.msra.mxu0 0.0
    %243 = vmatprep.subr.mxu0 0.0
    %244 = vmatpush1.msra.mxu0 0.0
    %245 = vmatprep.subr.mxu0 0.0
    %246 = vmatpush1.msra.mxu0 0.0
    %247 = vmatprep.subr.mxu0 0.0
    %248 = vmatpush1.msra.mxu0 0.0
    %249 = vmatprep.subr.mxu0 0.0
    %250 = vmatpush1.msra.mxu0 0.0
    %251 = vmatprep.subr.mxu0 0.0
    %252 = vmatpush1.msra.mxu0 0.0
    %253 = vmatprep.subr.mxu0 0.0
    %254 = vmatpush1.msra.mxu0 0.0
    %255 = vmatprep.subr.mxu0 0.0
    %256 = vmatpush1.msra.mxu0 0.0
    %257 = vmatprep.subr.mxu0 0.0
    %258 = vmatpush1.msra.mxu0 0.0
    %259 = vmatprep.subr.mxu0 0.0
    %260 = vmatpush1.msra.mxu0 0.0
    %261 = vmatprep.subr.mxu0 0.0
    %262 = vmatpush1.msra.mxu0 0.0
    %263 = vmatprep.subr.mxu0 0.0
    %264 = vmatpush1.msra.mxu0 0.0
    %265 = vmatprep.mubr.f32.mxu0 0.0
    %266 = vmatmul.mubr.f32.gmra.mrb[0].mxu0 %v183
    %v267 = vpop.f32.mrb[0].mxu0
    %v268 = vadd.f32 0.0, %v267
    %v269 = vpop.f32.mrb[0].mxu0
    %270 = vdwg.mxu0
    %v271 = vadd.f32 %v184, %v268
    %272 = vst [vmem:[#allocation2] sm:$0xff] %v271
    // Predicated region
    $region38: #{tpu_custom_call.1} parent=1 // pred_check
      %p273 = pneg %p84
    $region39: #{tpu_custom_call.1} parent=1 // pred_check_branch
      %275 = sbr.rel (%p273) target = $region41
    $region40: #{tpu_custom_call.1} parent=1 // pred_region
      %p276 = scmp.eq.s32.totalorder 0, 0
      %v277 = vld [vmem:[%s4] sm:$0x1]
      %s278 = scalar_select %p276, 1, 0
      %v279 = vstv %s278
      %vm280 = vcmp.eq.s32.totalorder %v279, 1
      %v281 = vsel %vm280, %v277, 0.0
      %v282 = vld [vmem:[#allocation2] sm:$0xff]
      %v284 = vlaneseq
      %v285 = vshrl.u32 %v284, 7
      %v286 = vsub.s32 0, %v285
      %v287 = vrot.slane %v281, %v286
      %v289 = vadd.f32 %v282, %v287
      %290 = vst [vmem:[#allocation9] sm:$0xff] %v289
    $region41: #{tpu_custom_call.1} parent=1 // pred_fallthru
      _
    // Predicated region
    $region42: #{tpu_custom_call.1} parent=1 // pred_check
      _
    $region43: #{tpu_custom_call.1} parent=1 // pred_check_branch
      %292 = sbr.rel (0) target = $region45
    $region44: #{tpu_custom_call.1} parent=1 // pred_region
      %s294 = ssub.s32 128, 128
      %295 = vsyncadd [#allocation5], %s294
      %s297 = sshll.u32 [#allocation9], 4
      %s298 = int_to_ptr.vmem [resolvable:$true] %s297
      %300 = dma.vmem_to_hbm [thread:$0]  %s298, 128, %s5, [#allocation5]
    $region45: #{tpu_custom_call.1} parent=1 // pred_fallthru
      _
    // Predicated region
    $region46: #{tpu_custom_call.1} parent=1 // pred_check
      _
    $region47: #{tpu_custom_call.1} parent=1 // pred_check_branch
      %302 = sbr.rel (0) target = $region49
    $region48: #{tpu_custom_call.1} parent=1 // pred_region
      %303 = dma.done [#allocation5], 128
    $region49: #{tpu_custom_call.1} parent=1 // pred_fallthru
      _
    %304 = vsyncpa [#allocation4], 1
    %305 = vsyncpa [#allocation7], 1
    %306 = vsyncpa [#allocation5], 1

</llo_original>
